<compile_context>
chip_gen: v5e
topology: v5e:2x2
jax: 0.10.0
libtpu: 0.0.40
codegen_flags: <defaults>
</compile_context>

<pallas_src>
import jax
import jax.numpy as jnp
from jax.experimental import pallas as pl
from jax.experimental.pallas import tpu as pltpu

_LANE = 128   # lane width
_SUB = 8      # sublane tile (f32)

# Generation-aware sizing:
#   set_budget : target bytes for one (L+1)-input block set (double-buffered by Pallas)
#   block_cap  : byte cap for a single per-array block (caps chunk rows, dtype-aware)
#   vmem_limit : explicit scoped-VMEM limit with headroom (None -> compiler default)
_GEN_PARAMS = {
    "v5e":     dict(set_budget=4 << 20,  block_cap=1 << 20, vmem_limit=32 << 20),
    "v6e":     dict(set_budget=8 << 20,  block_cap=2 << 20, vmem_limit=64 << 20),
    "v7x":     dict(set_budget=10 << 20, block_cap=2 << 20, vmem_limit=48 << 20),
    "unknown": dict(set_budget=4 << 20,  block_cap=1 << 20, vmem_limit=None),
}


def _cdiv(a, b):
    return -(-a // b)


def _round_up(a, b):
    return _cdiv(a, b) * b


def _tpu_generation():
    try:
        kind = jax.devices()[0].device_kind.lower()
    except Exception:
        return "unknown"
    if "v5 lite" in kind or "v5e" in kind or "v5lite" in kind:
        return "v5e"
    if "v6" in kind or "trillium" in kind:
        return "v6e"
    if "v7" in kind or "7x" in kind:
        return "v7x"
    return "unknown"


def _choose_chunk(itemsizes, rows, gen):
    """Rows (sublanes) per grid step: big enough to amortize the ~0.35us/step
    overhead, byte-capped (so bf16 gets 2x the rows of f32), dtype-aware minimum
    (16 rows for bf16, 32 for int8/fp8), and never larger than needed."""
    p = _GEN_PARAMS[gen]
    # native packed-tile minimum for the narrowest dtype present
    min_rows = max(_SUB * max(1, 4 // s) for s in itemsizes)
    row_bytes = _LANE * sum(itemsizes)               # bytes/row across all streams
    budget_rows = p["set_budget"] // row_bytes
    cap_rows = p["block_cap"] // (_LANE * max(itemsizes))
    chunk = min(budget_rows, cap_rows)
    chunk = max(min_rows, (chunk // min_rows) * min_rows)
    chunk = min(chunk, _round_up(rows, min_rows))
    return chunk


def _make_sse_kernel(num_layers, chunk, inner, num_splits, num_chunks, tail_rows):
    folds = chunk // _SUB
    covered = num_splits * inner                     # logical chunks covered by the grid
    full_chunks = num_chunks - (1 if tail_rows else 0)

    def kernel(*refs):
        x_refs = refs[:num_layers]
        y_ref = refs[num_layers]
        o_ref = refs[num_layers + 1]                 # (L, 8, 128) resident accumulator

        k = pl.program_id(1)

        @pl.when(k == 0)
        def _():
            o_ref[...] = jnp.zeros_like(o_ref)

        def accumulate(valid_rows):
            # TODO(synk): on v7x with bf16 inputs the VPU can become a
            # co-bottleneck; offloading the sublane reduce-add to the idle MXU
            # (ones-row matmul) would return this to pure HBM-bound.
            y = y_ref[...].astype(jnp.float32)       # truth read/cast once per tile
            if valid_rows is not None:
                keep = (jax.lax.broadcasted_iota(jnp.int32, (chunk, _LANE), 0)
                        < valid_rows)
            for l in range(num_layers):
                d = x_refs[l][...].astype(jnp.float32) - y
                if valid_rows is not None:
                    # Mask BEFORE squaring so stale (possibly non-finite) VMEM
                    # padding of the ragged block can never poison the sum.
                    d = jnp.where(keep, d, 0.0)
                # tile-aligned view (chunk/8, 8, 128); sum(axis=0) is pure VPU adds
                o_ref[l, :, :] += jnp.sum((d * d).reshape(folds, _SUB, _LANE),
                                          axis=0)

        if tail_rows == 0 and covered == num_chunks:
            accumulate(None)                         # clean path: no mask, no branch
        else:
            c = pl.program_id(0) * inner + k         # logical chunk index
            if full_chunks > 0:
                @pl.when(c < full_chunks)
                def _():
                    accumulate(None)                 # bulk chunks: unmasked
            if tail_rows:
                @pl.when(c == num_chunks - 1)
                def _():
                    accumulate(tail_rows)            # partial last chunk: static mask
            # c >= num_chunks: duplicated chunk from the 2-way split -> skipped.

    return kernel


def _per_layer_sse(layer_mats, truth_mat, *, chunk, num_splits, inner,
                   num_chunks, tail_rows, vmem_limit):
    """Returns (L,) per-layer sum of squared errors (over the first `rows` rows)."""
    num_layers = len(layer_mats)
    rows = truth_mat.shape[0]
    last_chunk = num_chunks - 1
    clamp_needed = (num_splits * inner) != num_chunks

    def in_idx(p, k):
        c = p * inner + k
        if clamp_needed:                             # keep duplicated steps in-bounds
            c = jnp.minimum(c, last_chunk)
        return (c, 0)

    in_specs = [pl.BlockSpec((chunk, _LANE), in_idx)
                for _ in range(num_layers + 1)]
    out_specs = pl.BlockSpec((num_layers, _SUB, _LANE), lambda p, k: (0, p, 0))

    bytes_in = sum(int(m.size) * jnp.dtype(m.dtype).itemsize
                   for m in (*layer_mats, truth_mat))

    out = pl.pallas_call(
        _make_sse_kernel(num_layers, chunk, inner, num_splits, num_chunks,
                         tail_rows),
        out_shape=jax.ShapeDtypeStruct(
            (num_layers, num_splits * _SUB, _LANE), jnp.float32),
        grid_spec=pltpu.PrefetchScalarGridSpec(
            num_scalar_prefetch=0,
            grid=(num_splits, inner),
            in_specs=in_specs,
            out_specs=out_specs,
        ),
        # TODO(synk): verify in the Mosaic dump that "parallel" actually shards
        # the leading axis across both v7x TensorCores; switch to
        # pltpu.CORE_PARALLEL on that axis if it does not.
        compiler_params=pltpu.CompilerParams(
            dimension_semantics=("parallel", "arbitrary"),
            vmem_limit_bytes=vmem_limit,
        ),
        cost_estimate=pl.CostEstimate(
            flops=3 * num_layers * rows * _LANE,
            transcendentals=0,
            bytes_accessed=bytes_in
            + num_layers * num_splits * _SUB * _LANE * 4,
        ),
    )(*layer_mats, truth_mat)

    # One tiny cross-lane reduction per layer, done by XLA on (L, splits*8, 128).
    return jnp.sum(out, axis=(1, 2))


def layer_loss(layers, truth, t, *, _force_chunk_rows=None):
    """Pallas implementation of LayerLoss.forward."""
    n = int(truth.size)
    gen = _tpu_generation()
    params = _GEN_PARAMS[gen]

    lane_rem = n % _LANE
    rows = _cdiv(n, _LANE)

    def to_mat(a):
        flat = a.reshape(-1)                         # row-major flatten: free
        if lane_rem:
            # TODO(synk): n % 128 != 0 forces one pad-to-lane copy; avoiding it
            # entirely would need manual 1-D HBM DMA handling in the kernel.
            flat = jnp.pad(flat, (0, _LANE - lane_rem))
        return flat.reshape(rows, _LANE)

    itemsizes = [jnp.dtype(a.dtype).itemsize for a in (*layers, truth)]
    chunk = _choose_chunk(itemsizes, rows, gen)
    if _force_chunk_rows is not None:                # testing knob only
        chunk = _force_chunk_rows

    num_chunks = _cdiv(rows, chunk)
    # Always give both TensorCores work when there is more than one chunk; odd
    # chunk counts just add one clamped+skipped duplicate iteration.
    num_splits = 2 if num_chunks >= 2 else 1
    inner = _cdiv(num_chunks, num_splits)
    tail_rows = rows % chunk                         # 0 -> last chunk is full

    xs = [to_mat(a) for a in layers]                 # native dtype; cast in-kernel
    y = to_mat(truth)

    sse = _per_layer_sse(xs, y, chunk=chunk, num_splits=num_splits, inner=inner,
                         num_chunks=num_chunks, tail_rows=tail_rows,
                         vmem_limit=params["vmem_limit"])                 # (L,)
    mse = sse / jnp.float32(n)                       # mean over the UNPADDED n
    return mse[-1] + t * jnp.sum(mse)


def _reference(layers, truth, t):
    mse = lambda a, b: jnp.mean(
        (a.astype(jnp.float32) - b.astype(jnp.float32)) ** 2)
    loss = mse(layers[-1], truth)
    for l in layers:
        loss = loss + t * mse(l, truth)
    return loss


if __name__ == "__main__":
    t = 0.5                       # cfg.l_layer
    num_layers = 3

    # Case 1: clean path (NCHW feature maps, n % 128 == 0, single full chunk).
    B, C, H, W = 2, 4, 16, 16
    keys = jax.random.split(jax.random.PRNGKey(0), num_layers + 1)
    layers1 = [jax.random.normal(keys[i], (B, C, H, W), dtype=jnp.float32)
               for i in range(num_layers)]
    truth1 = jax.random.normal(keys[-1], (B, C, H, W), dtype=jnp.float32)
    out1 = jax.block_until_ready(layer_loss(layers1, truth1, t))
    ref1 = jax.block_until_ready(_reference(layers1, truth1, t))
    assert jnp.allclose(out1, ref1, rtol=2e-5, atol=2e-5), (out1, ref1)

    # Case 2: ragged (n % 128 != 0, rows < chunk) -> in-kernel tail mask path.
    keys2 = jax.random.split(jax.random.PRNGKey(1), num_layers + 1)
    layers2 = [jax.random.normal(keys2[i], (2, 3, 13, 16), dtype=jnp.float32)
               for i in range(num_layers)]
    truth2 = jax.random.normal(keys2[-1], (2, 3, 13, 16), dtype=jnp.float32)
    out2 = jax.block_until_ready(layer_loss(layers2, truth2, t))
    ref2 = jax.block_until_ready(_reference(layers2, truth2, t))
    assert jnp.allclose(out2, ref2, rtol=2e-5, atol=2e-5), (out2, ref2)

    # Case 3: bf16, odd chunk count + 2-way split + partial tail (forced small
    # chunk exercises the clamp/skip and mask paths on a multi-chunk grid).
    keys3 = jax.random.split(jax.random.PRNGKey(2), num_layers + 1)
    layers3 = [jax.random.normal(keys3[i], (2, 4, 13, 256), dtype=jnp.bfloat16)
               for i in range(num_layers)]
    truth3 = jax.random.normal(keys3[-1], (2, 4, 13, 256), dtype=jnp.bfloat16)
    out3 = jax.block_until_ready(
        layer_loss(layers3, truth3, t, _force_chunk_rows=32))
    ref3 = jax.block_until_ready(_reference(layers3, truth3, t))
    assert jnp.allclose(out3, ref3, rtol=1e-4, atol=1e-4), (out3, ref3)

    print("KERNEL_OK")
</pallas_src>

<mosaic_0001>
module attributes {stable_mosaic.version = 11 : i64} {
  func.func @kernel(%arg0: i32, %arg1: i32, %arg2: memref<16x128xf32, #tpu.memory_space<vmem>>, %arg3: memref<16x128xf32, #tpu.memory_space<vmem>>, %arg4: memref<16x128xf32, #tpu.memory_space<vmem>>, %arg5: memref<16x128xf32, #tpu.memory_space<vmem>>, %arg6: memref<3x8x128xf32, #tpu.memory_space<vmem>>) attributes {dimension_semantics = [#tpu.dimension_semantics<parallel>, #tpu.dimension_semantics<arbitrary>], iteration_bounds = array<i64: 1, 1>, scalar_prefetch = 0 : i64, scratch_operands = 0 : i64, tpu.core_type = #tpu.core_type<tc>, window_params = [{transform_indices = @transform_0, window_bounds = array<i64: 16, 128>}, {transform_indices = @transform_1, window_bounds = array<i64: 16, 128>}, {transform_indices = @transform_2, window_bounds = array<i64: 16, 128>}, {transform_indices = @transform_3, window_bounds = array<i64: 16, 128>}, {transform_indices = @transform_4, window_bounds = array<i64: 3, 8, 128>}]} {
    %c0_i32 = arith.constant 0 : i32
    %0 = arith.cmpi eq, %arg1, %c0_i32 : i32
    %1 = arith.extui %0 : i1 to i32
    %c0_i32_0 = arith.constant 0 : i32
    %2 = arith.cmpi ne, %1, %c0_i32_0 : i32
    scf.if %2 {
      %cst_26 = arith.constant 0.000000e+00 : f32
      %37 = vector.broadcast %cst_26 : f32 to vector<3x8x128xf32>
      %c0_27 = arith.constant 0 : index
      %c0_28 = arith.constant 0 : index
      %c0_29 = arith.constant 0 : index
      %38 = vector.load %arg6[%c0_27, %c0_28, %c0_29] : memref<3x8x128xf32, #tpu.memory_space<vmem>>, vector<3x8x128xf32>
      tpu.vector_store %arg6[%c0_27, %c0_28, %c0_29], %37 {strides = array<i32>} : memref<3x8x128xf32, #tpu.memory_space<vmem>>, vector<3x8x128xf32>,
    } else {
    }
    %c0 = arith.constant 0 : index
    %c0_1 = arith.constant 0 : index
    %3 = vector.load %arg5[%c0, %c0_1] : memref<16x128xf32, #tpu.memory_space<vmem>>, vector<16x128xf32>
    %c0_2 = arith.constant 0 : index
    %c0_3 = arith.constant 0 : index
    %4 = vector.load %arg2[%c0_2, %c0_3] : memref<16x128xf32, #tpu.memory_space<vmem>>, vector<16x128xf32>
    %5 = arith.subf %4, %3 : vector<16x128xf32>
    %c0_4 = arith.constant 0 : index
    %c0_5 = arith.constant 0 : index
    %c0_6 = arith.constant 0 : index
    %6 = vector.load %arg6[%c0_4, %c0_5, %c0_6] : memref<3x8x128xf32, #tpu.memory_space<vmem>>, vector<1x8x128xf32>
    %7 = vector.shape_cast %6 : vector<1x8x128xf32> to vector<8x128xf32>
    %8 = arith.mulf %5, %5 : vector<16x128xf32>
    %9 = vector.shape_cast %8 : vector<16x128xf32> to vector<2x8x128xf32>
    %cst = arith.constant dense<0.000000e+00> : vector<8x128xf32>
    %10 = vector.multi_reduction <add>, %9, %cst [0] : vector<2x8x128xf32> to vector<8x128xf32>
    %11 = arith.addf %7, %10 : vector<8x128xf32>
    %c0_7 = arith.constant 0 : index
    %c0_8 = arith.constant 0 : index
    %c0_9 = arith.constant 0 : index
    %12 = vector.load %arg6[%c0_7, %c0_8, %c0_9] : memref<3x8x128xf32, #tpu.memory_space<vmem>>, vector<1x8x128xf32>
    %13 = vector.shape_cast %12 : vector<1x8x128xf32> to vector<8x128xf32>
    %14 = vector.shape_cast %11 : vector<8x128xf32> to vector<1x8x128xf32>
    tpu.vector_store %arg6[%c0_7, %c0_8, %c0_9], %14 {strides = array<i32>} : memref<3x8x128xf32, #tpu.memory_space<vmem>>, vector<1x8x128xf32>,
    %c0_10 = arith.constant 0 : index
    %c0_11 = arith.constant 0 : index
    %15 = vector.load %arg3[%c0_10, %c0_11] : memref<16x128xf32, #tpu.memory_space<vmem>>, vector<16x128xf32>
    %16 = arith.subf %15, %3 : vector<16x128xf32>
    %c1 = arith.constant 1 : index
    %c0_12 = arith.constant 0 : index
    %c0_13 = arith.constant 0 : index
    %17 = vector.load %arg6[%c1, %c0_12, %c0_13] : memref<3x8x128xf32, #tpu.memory_space<vmem>>, vector<1x8x128xf32>
    %18 = vector.shape_cast %17 : vector<1x8x128xf32> to vector<8x128xf32>
    %19 = arith.mulf %16, %16 : vector<16x128xf32>
    %20 = vector.shape_cast %19 : vector<16x128xf32> to vector<2x8x128xf32>
    %cst_14 = arith.constant dense<0.000000e+00> : vector<8x128xf32>
    %21 = vector.multi_reduction <add>, %20, %cst_14 [0] : vector<2x8x128xf32> to vector<8x128xf32>
    %22 = arith.addf %18, %21 : vector<8x128xf32>
    %c1_15 = arith.constant 1 : index
    %c0_16 = arith.constant 0 : index
    %c0_17 = arith.constant 0 : index
    %23 = vector.load %arg6[%c1_15, %c0_16, %c0_17] : memref<3x8x128xf32, #tpu.memory_space<vmem>>, vector<1x8x128xf32>
    %24 = vector.shape_cast %23 : vector<1x8x128xf32> to vector<8x128xf32>
    %25 = vector.shape_cast %22 : vector<8x128xf32> to vector<1x8x128xf32>
    tpu.vector_store %arg6[%c1_15, %c0_16, %c0_17], %25 {strides = array<i32>} : memref<3x8x128xf32, #tpu.memory_space<vmem>>, vector<1x8x128xf32>,
    %c0_18 = arith.constant 0 : index
    %c0_19 = arith.constant 0 : index
    %26 = vector.load %arg4[%c0_18, %c0_19] : memref<16x128xf32, #tpu.memory_space<vmem>>, vector<16x128xf32>
    %27 = arith.subf %26, %3 : vector<16x128xf32>
    %c2 = arith.constant 2 : index
    %c0_20 = arith.constant 0 : index
    %c0_21 = arith.constant 0 : index
    %28 = vector.load %arg6[%c2, %c0_20, %c0_21] : memref<3x8x128xf32, #tpu.memory_space<vmem>>, vector<1x8x128xf32>
    %29 = vector.shape_cast %28 : vector<1x8x128xf32> to vector<8x128xf32>
    %30 = arith.mulf %27, %27 : vector<16x128xf32>
    %31 = vector.shape_cast %30 : vector<16x128xf32> to vector<2x8x128xf32>
    %cst_22 = arith.constant dense<0.000000e+00> : vector<8x128xf32>
    %32 = vector.multi_reduction <add>, %31, %cst_22 [0] : vector<2x8x128xf32> to vector<8x128xf32>
    %33 = arith.addf %29, %32 : vector<8x128xf32>
    %c2_23 = arith.constant 2 : index
    %c0_24 = arith.constant 0 : index
    %c0_25 = arith.constant 0 : index
    %34 = vector.load %arg6[%c2_23, %c0_24, %c0_25] : memref<3x8x128xf32, #tpu.memory_space<vmem>>, vector<1x8x128xf32>
    %35 = vector.shape_cast %34 : vector<1x8x128xf32> to vector<8x128xf32>
    %36 = vector.shape_cast %33 : vector<8x128xf32> to vector<1x8x128xf32>
    tpu.vector_store %arg6[%c2_23, %c0_24, %c0_25], %36 {strides = array<i32>} : memref<3x8x128xf32, #tpu.memory_space<vmem>>, vector<1x8x128xf32>,
    return
  }
  func.func @transform_0(%arg0: i32, %arg1: i32) -> (i32, i32) {
    %c1_i32 = arith.constant 1 : i32
    %0 = arith.muli %arg0, %c1_i32 : i32
    %1 = arith.addi %0, %arg1 : i32
    %c0_i32 = arith.constant 0 : i32
    %c0_i32_0 = arith.constant 0 : i32
    return %1, %c0_i32 : i32, i32
  }
  func.func @transform_1(%arg0: i32, %arg1: i32) -> (i32, i32) {
    %c1_i32 = arith.constant 1 : i32
    %0 = arith.muli %arg0, %c1_i32 : i32
    %1 = arith.addi %0, %arg1 : i32
    %c0_i32 = arith.constant 0 : i32
    %c0_i32_0 = arith.constant 0 : i32
    return %1, %c0_i32 : i32, i32
  }
  func.func @transform_2(%arg0: i32, %arg1: i32) -> (i32, i32) {
    %c1_i32 = arith.constant 1 : i32
    %0 = arith.muli %arg0, %c1_i32 : i32
    %1 = arith.addi %0, %arg1 : i32
    %c0_i32 = arith.constant 0 : i32
    %c0_i32_0 = arith.constant 0 : i32
    return %1, %c0_i32 : i32, i32
  }
  func.func @transform_3(%arg0: i32, %arg1: i32) -> (i32, i32) {
    %c1_i32 = arith.constant 1 : i32
    %0 = arith.muli %arg0, %c1_i32 : i32
    %1 = arith.addi %0, %arg1 : i32
    %c0_i32 = arith.constant 0 : i32
    %c0_i32_0 = arith.constant 0 : i32
    return %1, %c0_i32 : i32, i32
  }
  func.func @transform_4(%arg0: i32, %arg1: i32) -> (i32, i32, i32) {
    %c0_i32 = arith.constant 0 : i32
    %c0_i32_0 = arith.constant 0 : i32
    %c0_i32_1 = arith.constant 0 : i32
    return %c0_i32, %arg0, %c0_i32_0 : i32, i32, i32
  }
}

</mosaic_0001>

<llo_original>
// kernel: tpu_custom_call.1
$region0: #{tpu_custom_call.1}
  #allocation0 [shape = 'u32[]', space=smem, size = 0x4, offset = 0x4, fixed_abs, tag = 'smem constant byte address 0x4 - core index']
  #allocation1 [shape = 'u32[72,128]{1,0:T(1,128)}', space=vmem, size = 0x9000, scoped, tag = 'internal scratch']
  %s0 = inlined_call_operand.hbm [shape: f32[16,128], index: 0, kind: input, shape index: {}]
  %s1 = inlined_call_operand.hbm [shape: f32[16,128], index: 1, kind: input, shape index: {}]
  %s2 = inlined_call_operand.hbm [shape: f32[16,128], index: 2, kind: input, shape index: {}]
  %s3 = inlined_call_operand.hbm [shape: f32[16,128], index: 3, kind: input, shape index: {}]
  %s4 = inlined_call_operand.hbm [shape: f32[3,8,128], index: 4, kind: output, shape index: {}]
  %s5 = sld [smem:[#allocation0]]
  $region46: #{tpu_custom_call.1} parent=0
    _
  %s7 = ssub.s32 1, %s5
  %s8 = scalar_select 0, %s7, %s5
  $region1: #{tpu_custom_call.1} parent=0
    #allocation2 [shape = 'u8[8192]{0}', space=vmem, size = 0x2000, scoped, tag = 'input window, operand 0, single buffered']
    #allocation3 [shape = 's32[1]{0}', space=sflag, size = 0x4, scoped, tag = 'scoped memory for tpu_custom_call.1']
    #allocation4 [shape = 's32[1]{0}', space=sflag, size = 0x4, scoped, tag = 'scoped memory for tpu_custom_call.1']
    #allocation5 [shape = 'u8[8192]{0}', space=vmem, size = 0x2000, scoped, tag = 'input window, operand 1, single buffered']
    #allocation6 [shape = 's32[1]{0}', space=sflag, size = 0x4, scoped, tag = 'scoped memory for tpu_custom_call.1']
    #allocation7 [shape = 'u8[8192]{0}', space=vmem, size = 0x2000, scoped, tag = 'input window, operand 2, single buffered']
    #allocation8 [shape = 'u8[8192]{0}', space=vmem, size = 0x2000, scoped, tag = 'input window, operand 3, single buffered']
    #allocation9 [shape = 's32[1]{0}', space=sflag, size = 0x4, scoped, tag = 'scoped memory for tpu_custom_call.1']
    #allocation10 [shape = 'u8[12288]{0}', space=vmem, size = 0x3000, scoped, tag = 'output window, operand 0, single buffered']
    %9 = vsyncpa [#allocation3], 0
    %10 = vsyncpa [#allocation6], 0
    %11 = vsyncpa [#allocation9], 0
    %12 = vsyncpa [#allocation4], 0
    // Predicated region
    $region2: #{tpu_custom_call.1} parent=1 // pred_check
      _
    $region3: #{tpu_custom_call.1} parent=1 // pred_check_branch
      %14 = sbr.rel (0) target = $region5
    $region4: #{tpu_custom_call.1} parent=1 // pred_region
      %s15 = sadd.s32 0, 0
      %s16 = smul.u32 2, %s15
      %18 = vsyncadd [#allocation3], 0
      %s19 = smul.addr %s16, 8
      %s20 = scalar_lea.hbm %s0, %s19
      %s21 = sshll.u32 %s20, 4
      %s22 = int_to_ptr.hbm [resolvable:$true] %s21
      %s23 = sshll.u32 [#allocation2], 4
      %s24 = int_to_ptr.vmem [resolvable:$true] %s23
      %29 = dma.hbm_to_vmem [thread:$0]  %s22, 256, %s24, [#allocation3], 128, 128, 8
    $region5: #{tpu_custom_call.1} parent=1 // pred_fallthru
      _
    // Predicated region
    $region6: #{tpu_custom_call.1} parent=1 // pred_check
      _
    $region7: #{tpu_custom_call.1} parent=1 // pred_check_branch
      %31 = sbr.rel (0) target = $region9
    $region8: #{tpu_custom_call.1} parent=1 // pred_region
      %s32 = sadd.s32 0, 0
      %s33 = smul.u32 2, %s32
      %35 = vsyncadd [#allocation6], 0
      %s36 = smul.addr %s33, 8
      %s37 = scalar_lea.hbm %s1, %s36
      %s38 = sshll.u32 %s37, 4
      %s39 = int_to_ptr.hbm [resolvable:$true] %s38
      %s40 = sshll.u32 [#allocation5], 4
      %s41 = int_to_ptr.vmem [resolvable:$true] %s40
      %46 = dma.hbm_to_vmem [thread:$0]  %s39, 256, %s41, [#allocation6], 128, 128, 8
    $region9: #{tpu_custom_call.1} parent=1 // pred_fallthru
      _
    // Predicated region
    $region10: #{tpu_custom_call.1} parent=1 // pred_check
      _
    $region11: #{tpu_custom_call.1} parent=1 // pred_check_branch
      %48 = sbr.rel (0) target = $region13
    $region12: #{tpu_custom_call.1} parent=1 // pred_region
      %s49 = sadd.s32 0, 0
      %s50 = smul.u32 2, %s49
      %52 = vsyncadd [#allocation6], 0
      %s53 = smul.addr %s50, 8
      %s54 = scalar_lea.hbm %s2, %s53
      %s55 = sshll.u32 %s54, 4
      %s56 = int_to_ptr.hbm [resolvable:$true] %s55
      %s57 = sshll.u32 [#allocation7], 4
      %s58 = int_to_ptr.vmem [resolvable:$true] %s57
      %63 = dma.hbm_to_vmem [thread:$0]  %s56, 256, %s58, [#allocation6], 128, 128, 8
    $region13: #{tpu_custom_call.1} parent=1 // pred_fallthru
      _
    // Predicated region
    $region14: #{tpu_custom_call.1} parent=1 // pred_check
      _
    $region15: #{tpu_custom_call.1} parent=1 // pred_check_branch
      %65 = sbr.rel (0) target = $region17
    $region16: #{tpu_custom_call.1} parent=1 // pred_region
      %s66 = sadd.s32 0, 0
      %s67 = smul.u32 2, %s66
      %69 = vsyncadd [#allocation9], 0
      %s70 = smul.addr %s67, 8
      %s71 = scalar_lea.hbm %s3, %s70
      %s72 = sshll.u32 %s71, 4
      %s73 = int_to_ptr.hbm [resolvable:$true] %s72
      %s74 = sshll.u32 [#allocation8], 4
      %s75 = int_to_ptr.vmem [resolvable:$true] %s74
      %80 = dma.hbm_to_vmem [thread:$0]  %s73, 256, %s75, [#allocation9], 128, 128, 8
    $region17: #{tpu_custom_call.1} parent=1 // pred_fallthru
      _
    // Predicated region
    $region18: #{tpu_custom_call.1} parent=1 // pred_check
      _
    $region19: #{tpu_custom_call.1} parent=1 // pred_check_branch
      %82 = sbr.rel (0) target = $region21
    $region20: #{tpu_custom_call.1} parent=1 // pred_region
      %84 = dma.done [#allocation3], 256
    $region21: #{tpu_custom_call.1} parent=1 // pred_fallthru
      _
    // Predicated region
    $region22: #{tpu_custom_call.1} parent=1 // pred_check
      _
    $region23: #{tpu_custom_call.1} parent=1 // pred_check_branch
      %86 = sbr.rel (0) target = $region25
    $region24: #{tpu_custom_call.1} parent=1 // pred_region
      %88 = dma.done [#allocation6], 256
    $region25: #{tpu_custom_call.1} parent=1 // pred_fallthru
      _
    // Predicated region
    $region26: #{tpu_custom_call.1} parent=1 // pred_check
      _
    $region27: #{tpu_custom_call.1} parent=1 // pred_check_branch
      %90 = sbr.rel (0) target = $region29
    $region28: #{tpu_custom_call.1} parent=1 // pred_region
      %92 = dma.done [#allocation6], 256
    $region29: #{tpu_custom_call.1} parent=1 // pred_fallthru
      _
    // Predicated region
    $region30: #{tpu_custom_call.1} parent=1 // pred_check
      _
    $region31: #{tpu_custom_call.1} parent=1 // pred_check_branch
      %94 = sbr.rel (0) target = $region33
    $region32: #{tpu_custom_call.1} parent=1 // pred_region
      %96 = dma.done [#allocation9], 256
    $region33: #{tpu_custom_call.1} parent=1 // pred_fallthru
      _
    %s97 = sadd.s32 0, 0
    %s98 = smul.u32 2, %s97
    %s99 = sadd.s32 0, 0
    %s100 = smul.u32 2, %s99
    %s101 = sadd.s32 0, 0
    %s102 = smul.u32 2, %s101
    %s103 = sadd.s32 0, 0
    %s104 = smul.u32 2, %s103
    %p105 = scmp.eq.s32.totalorder 0, 0
    // Predicated region
    $region34: #{tpu_custom_call.1} parent=1 // pred_check
      %p106 = pneg %p105
    $region35: #{tpu_custom_call.1} parent=1 // pred_check_branch
      %108 = sbr.rel (%p106) target = $region37
    $region36: #{tpu_custom_call.1} parent=1 // pred_region
      %109 = vst [vmem:[#allocation10] sm:$0xff] 0.0
      %110 = vst [vmem:[#allocation10 + $0x8] sm:$0xff] 0.0
      %111 = vst [vmem:[#allocation10 + $0x10] sm:$0xff] 0.0
    $region37: #{tpu_custom_call.1} parent=1 // pred_fallthru
      _
    %v112 = vld [vmem:[#allocation8] sm:$0xff]
    %v113 = vld [vmem:[#allocation8 + $0x8] sm:$0xff]
    %v114 = vld [vmem:[#allocation2] sm:$0xff]
    %v115 = vld [vmem:[#allocation2 + $0x8] sm:$0xff]
    %v116 = vsub.f32 %v114, %v112
    %v117 = vsub.f32 %v115, %v113
    %v118 = vld [vmem:[#allocation10] sm:$0xff]
    %v119 = vmul.f32 %v116, %v116
    %v120 = vmul.f32 %v117, %v117
    %v121 = vadd.f32 %v119, %v120
    %v122 = vadd.f32 %v118, %v121
    %123 = vst [vmem:[#allocation10] sm:$0xff] %v122
    %v124 = vld [vmem:[#allocation5] sm:$0xff]
    %v125 = vld [vmem:[#allocation5 + $0x8] sm:$0xff]
    %v126 = vsub.f32 %v124, %v112
    %v127 = vsub.f32 %v125, %v113
    %s128 = scalar_lea.vmem [#allocation10], 8
    %v129 = vld [vmem:[%s128] sm:$0xff]
    %v130 = vmul.f32 %v126, %v126
    %v131 = vmul.f32 %v127, %v127
    %v132 = vadd.f32 %v130, %v131
    %v133 = vadd.f32 %v129, %v132
    %134 = vst [vmem:[%s128] sm:$0xff] %v133
    %v135 = vld [vmem:[#allocation7] sm:$0xff]
    %v136 = vld [vmem:[#allocation7 + $0x8] sm:$0xff]
    %v137 = vsub.f32 %v135, %v112
    %v138 = vsub.f32 %v136, %v113
    %s139 = scalar_lea.vmem [#allocation10], 16
    %v140 = vld [vmem:[%s139] sm:$0xff]
    %v141 = vmul.f32 %v137, %v137
    %v142 = vmul.f32 %v138, %v138
    %v143 = vadd.f32 %v141, %v142
    %v144 = vadd.f32 %v140, %v143
    %145 = vst [vmem:[%s139] sm:$0xff] %v144
    // Predicated region
    $region38: #{tpu_custom_call.1} parent=1 // pred_check
      _
    $region39: #{tpu_custom_call.1} parent=1 // pred_check_branch
      %147 = sbr.rel (0) target = $region41
    $region40: #{tpu_custom_call.1} parent=1 // pred_region
      %149 = vsyncadd [#allocation4], 0
      %s150 = sshll.u32 [#allocation10], 4
      %s151 = int_to_ptr.vmem [resolvable:$true] %s150
      %s152 = sshll.u32 %s4, 4
      %s153 = int_to_ptr.hbm [resolvable:$true] %s152
      %158 = dma.vmem_to_hbm [thread:$0]  %s151, 384, %s153, [#allocation4], 128, 128, 8
    $region41: #{tpu_custom_call.1} parent=1 // pred_fallthru
      _
    // Predicated region
    $region42: #{tpu_custom_call.1} parent=1 // pred_check
      _
    $region43: #{tpu_custom_call.1} parent=1 // pred_check_branch
      %160 = sbr.rel (0) target = $region45
    $region44: #{tpu_custom_call.1} parent=1 // pred_region
      %162 = dma.done [#allocation4], 384
    $region45: #{tpu_custom_call.1} parent=1 // pred_fallthru
      _
    %163 = vsyncpa [#allocation3], 1
    %164 = vsyncpa [#allocation6], 1
    %165 = vsyncpa [#allocation9], 1
    %166 = vsyncpa [#allocation4], 1

</llo_original>
